<compile_context>
chip_gen: v7x
topology: tpu7x:2x2x1
jax: 0.10.0
libtpu: 0.0.40
codegen_flags: <defaults>
</compile_context>

<pallas_src>
import functools
import math

import jax
import jax.numpy as jnp
from jax.experimental import pallas as pl
from jax.experimental.pallas import tpu as pltpu

# ---- Renderer config (mirrors Renderer.__init__ defaults, small demo sizes) -------------------
IMAGE_SIZE = 16           # cfgs['out_image_size'] (small demo value)
FOV_DEG = 25.0            # cfgs['fov']
CAM_Z = 10.0              # cfgs['cam_pos_z_offset']
ZNEAR, ZFAR = 1.0, 100.0  # FoVPerspectiveCameras defaults
EPS = 1e-7                # eps passed to transform_points_screen in render_flow

S_FOV = 1.0 / math.tan(math.radians(FOV_DEG) / 2.0)
HALF = IMAGE_SIZE / 2.0
SXY = S_FOV * HALF                    # pre-folded NDC->screen scale
Z_SCALE = ZFAR / (ZFAR - ZNEAR)       # pre-folded z_ndc scale
FLOW_SCALE = 0.5 / IMAGE_SIZE

LANE = 128
SUBLANE = 8


def _round_up(x, m):
    return ((x + m - 1) // m) * m


# ------------------------------- fused Pallas kernel --------------------------------------------
def _transform_project_flow_kernel(affine_ref, verts_ref, world_ref, screen_ref, *flow_refs):
    """Pose transform + camera projection (+ fused per-vertex flow) on one vertex chunk.

    affine_ref : VMEM (BF, 12)      per folded (b*f) frame: [R00..R22 | t0 t1 t2]
    verts_ref  : VMEM (3, BF, VT)   channel-major input vertices
    world_ref  : VMEM (3, BF, VT)   deformed world-space vertices
    screen_ref : VMEM (3, BF, VT)   screen-space (x_pix, y_pix, z_ndc)
    flow_refs  : optional VMEM (2, BF, VT) per-vertex flow texture (row i = frame i+1 - frame i;
                 rows at batch boundaries / padding are garbage and sliced off by the wrapper)
    """
    a = affine_ref[...]                       # (BF, 12) — loaded once per grid step
    vx = verts_ref[0]                         # (BF, VT)
    vy = verts_ref[1]
    vz = verts_ref[2]

    def c(k):                                 # per-frame coefficient, broadcast over lanes
        return a[:, k:k + 1]                  # (BF, 1)

    # world = verts @ R_pose + t_pose   (row-vector convention as pytorch3d Rotate/Translate)
    wx = vx * c(0) + vy * c(3) + vz * c(6) + c(9)
    wy = vx * c(1) + vy * c(4) + vz * c(7) + c(10)
    wz = vx * c(2) + vy * c(5) + vz * c(8) + c(11)
    world_ref[0] = wx                         # direct per-channel stores, lane-dense (VT % 128 == 0)
    world_ref[1] = wy
    world_ref[2] = wz

    # camera view transform: X_view = X_world @ R_cam + T_cam, R_cam = diag(-1,1,-1), T=(0,0,CAM_Z)
    xv = -wx
    yv = wy
    zv = CAM_Z - wz

    sign = jnp.where(zv >= 0.0, 1.0, -1.0)
    zsafe = sign * jnp.maximum(jnp.abs(zv), EPS)
    inv_z = 1.0 / zsafe                       # exact reciprocal (approx vrcp broke tolerance)

    # FoV perspective projection + NDC (+x left, +y up) -> screen pixels
    xs = HALF - SXY * xv * inv_z
    ys = HALF - SXY * yv * inv_z
    z_ndc = Z_SCALE * (zv - ZNEAR) * inv_z
    screen_ref[0] = xs
    screen_ref[1] = ys
    screen_ref[2] = z_ndc

    if flow_refs:                             # fused render_flow vertex flow (xy stays in VMEM)
        flow_ref = flow_refs[0]               # (2, BF, VT)
        xs_next = jnp.concatenate([xs[1:], xs[-1:]], axis=0)   # sublane shift (full-block write)
        ys_next = jnp.concatenate([ys[1:], ys[-1:]], axis=0)
        flow_ref[0] = (xs_next - xs) * FLOW_SCALE + 0.5
        flow_ref[1] = (ys_next - ys) * FLOW_SCALE + 0.5


# ------------------------------- packed (zero-plumbing) entry point ------------------------------
def transform_project_flow_packed(affine, verts_cm, *, want_flow=True,
                                  vmem_budget_bytes=16 * 1024 * 1024):
    """Fast path on channel-major, sublane/lane-packed data (no HBM layout plumbing).

    affine   : (BF_pad, 12) f32, rows = folded (b*f) frames, pad rows zero.
    verts_cm : (3, BF_pad, Vp) f32, BF_pad % 8 == 0, Vp % 128 == 0, padding zero.
    Returns (world_cm, screen_cm[, flow_cm]) in the same packed layout.
    """
    three, bf_pad, vp = verts_cm.shape
    assert three == 3 and bf_pad % SUBLANE == 0 and vp % LANE == 0
    assert affine.shape == (bf_pad, 12)

    # f32 slabs touched per vertex column: 3 in + 3 world + 3 screen (+ 2 flow)
    slabs = 9 + (2 if want_flow else 0)

    # Vertex (lane) tile: largest multiple of 128 that divides Vp and keeps the
    # double-buffered per-step working set inside the budget (v7x-safe: <= ~16 MiB of 32 MiB
    # scoped / 64 MiB physical VMEM; also gives v5e/v6e blocks of 100s of KB per step).
    max_tile_elems = max(LANE, vmem_budget_bytes // (slabs * 4 * 2 * bf_pad))
    n_blocks = vp // LANE
    best = 1
    for cand in range(1, n_blocks + 1):
        if n_blocks % cand == 0 and cand * LANE <= max_tile_elems:
            best = cand
    vt = best * LANE
    grid = (vp // vt,)

    out_shape = [jax.ShapeDtypeStruct((3, bf_pad, vp), jnp.float32),    # world
                 jax.ShapeDtypeStruct((3, bf_pad, vp), jnp.float32)]    # screen
    out_specs = [pl.BlockSpec((3, bf_pad, vt), lambda j: (0, 0, j)),
                 pl.BlockSpec((3, bf_pad, vt), lambda j: (0, 0, j))]
    if want_flow:
        out_shape.append(jax.ShapeDtypeStruct((2, bf_pad, vp), jnp.float32))
        out_specs.append(pl.BlockSpec((2, bf_pad, vt), lambda j: (0, 0, j)))

    cost = pl.CostEstimate(
        flops=40 * bf_pad * vp,
        transcendentals=bf_pad * vp,
        bytes_accessed=slabs * bf_pad * vp * 4 + bf_pad * 12 * 4)

    return pl.pallas_call(
        _transform_project_flow_kernel,
        out_shape=tuple(out_shape),
        grid=grid,
        in_specs=[
            pl.BlockSpec((bf_pad, 12), lambda j: (0, 0)),               # tiny, same block each step
            pl.BlockSpec((3, bf_pad, vt), lambda j: (0, 0, j)),
        ],
        out_specs=tuple(out_specs),
        compiler_params=pltpu.CompilerParams(
            dimension_semantics=("parallel",),
            vmem_limit_bytes=32 * 1024 * 1024),
        cost_estimate=cost,
    )(affine, verts_cm)


# ------------------------------- plain-JAX glue --------------------------------------------------
def euler_angles_to_matrix_xyz(angles):
    """pytorch3d.transforms.euler_angles_to_matrix(..., convention='XYZ'): R = Rx @ Ry @ Rz."""
    ax, ay, az = angles[..., 0], angles[..., 1], angles[..., 2]
    cx, sx = jnp.cos(ax), jnp.sin(ax)
    cy, sy = jnp.cos(ay), jnp.sin(ay)
    cz, sz = jnp.cos(az), jnp.sin(az)
    one, zero = jnp.ones_like(ax), jnp.zeros_like(ax)
    shp = angles.shape[:-1] + (3, 3)
    Rx = jnp.stack([one, zero, zero, zero, cx, -sx, zero, sx, cx], -1).reshape(shp)
    Ry = jnp.stack([cy, zero, sy, zero, one, zero, -sy, zero, cy], -1).reshape(shp)
    Rz = jnp.stack([cz, -sz, zero, sz, cz, zero, zero, zero, one], -1).reshape(shp)
    return Rx @ Ry @ Rz


@functools.partial(jax.jit, static_argnames=("render_flow",))
def renderer_forward(pose, texture, shape, render_flow=True):
    """Mirrors Renderer.forward(pose, texture, shape, render_flow).

    pose    : (b, f, 6)   first 3 = euler angles (XYZ), last 3 = translation
    texture : (b, f, c, h, w) -- consumed only by the (un-implemented) rasterizer
    shape   : (b, f, V, 3)
    Returns (image, flow, (deformed_shape, verts_2d)); image is None (see TODO above).

    NOTE: this wrapper pays one XLA-fused layout conversion on each side of the kernel to honor
    the module's (b,f,V,3) interface. A channel-major pipeline should keep vertices as
    (3, b*f, Vp) end-to-end and call `transform_project_flow_packed` directly (zero plumbing).
    """
    del texture  # TODO(synk): used only by TexturesUV + SoftPhongShader rasterization path.
    b, f, V, _ = shape.shape
    want_flow = bool(render_flow) and f >= 2
    bf = b * f
    bf_pad = _round_up(bf, SUBLANE)
    vp = _round_up(V, LANE)

    # per-frame affine: 12 coefficients [R row-major | t], folded over (b, f) and sublane-padded.
    R = euler_angles_to_matrix_xyz(pose[..., :3])                          # (b, f, 3, 3)
    t = pose[..., -3:]                                                     # (b, f, 3)
    affine = jnp.concatenate([R.reshape(bf, 9), t.reshape(bf, 3)], -1).astype(jnp.float32)
    affine = jnp.pad(affine, ((0, bf_pad - bf), (0, 0)))                   # (BF_pad, 12)

    # channel-major, (b,f) folded to sublanes, vertex index padded to lanes.
    verts_cm = jnp.transpose(shape.astype(jnp.float32), (3, 0, 1, 2)).reshape(3, bf, V)
    verts_cm = jnp.pad(verts_cm, ((0, 0), (0, bf_pad - bf), (0, vp - V)))  # (3, BF_pad, Vp)

    results = transform_project_flow_packed(affine, verts_cm, want_flow=want_flow)
    world_cm, screen_cm = results[0], results[1]

    deformed_shape = jnp.transpose(world_cm[:, :bf, :V].reshape(3, b, f, V), (1, 2, 3, 0))
    verts_2d = jnp.transpose(screen_cm[:, :bf, :V].reshape(3, b, f, V), (1, 2, 3, 0))

    flow = None
    if want_flow:
        flow_cm = results[2][:, :bf, :V].reshape(2, b, f, V)[:, :, :f - 1]  # drop cross-batch rows
        flow = jnp.transpose(flow_cm, (1, 2, 3, 0))                         # (b, f-1, V, 2)

    # TODO(synk): soft rasterization of the textured mesh / flow textures is not representable
    #             as a Pallas kernel here; `image` is therefore None.
    image = None
    return image, flow, (deformed_shape, verts_2d)


# ------------------------------- pure-JAX reference (for a sanity check) -------------------------
def _reference(pose, shape):
    R = euler_angles_to_matrix_xyz(pose[..., :3])                          # (b, f, 3, 3)
    t = pose[..., -3:]
    world = jnp.einsum('bfvi,bfij->bfvj', shape, R,
                       precision=jax.lax.Precision.HIGHEST) + t[:, :, None, :]
    xv, yv, zv = -world[..., 0], world[..., 1], CAM_Z - world[..., 2]
    sign = jnp.where(zv >= 0.0, 1.0, -1.0)
    inv_z = 1.0 / (sign * jnp.maximum(jnp.abs(zv), EPS))
    xs = HALF - SXY * xv * inv_z
    ys = HALF - SXY * yv * inv_z
    zn = Z_SCALE * (zv - ZNEAR) * inv_z
    verts_2d = jnp.stack([xs, ys, zn], axis=-1)
    flow = (verts_2d[:, 1:, :, :2] - verts_2d[:, :-1, :, :2]) * FLOW_SCALE + 0.5
    return world, verts_2d, flow


# ------------------------------- demo -------------------------------------------------------------
if __name__ == "__main__":
    key = jax.random.PRNGKey(0)
    b, f, V = 2, 4, 162          # 162 = ico-sphere(subdiv=2) vertex count
    c, h, w = 3, 16, 16

    k1, k2, k3, k4 = jax.random.split(key, 4)
    # synthetic ico-sphere-like base vertices (unit sphere), deterministic
    base = jax.random.normal(k1, (V, 3), dtype=jnp.float32)
    base = base / (jnp.linalg.norm(base, axis=-1, keepdims=True) + 1e-6)
    shape = base[None, None] + 0.05 * jax.random.normal(k2, (b, f, V, 3), dtype=jnp.float32)

    angles = 0.2 * jax.random.normal(k3, (b, f, 3), dtype=jnp.float32)
    trans = 0.3 * jax.random.normal(k4, (b, f, 3), dtype=jnp.float32)
    pose = jnp.concatenate([angles, trans], axis=-1)                       # (b, f, 6)

    texture = jax.random.uniform(k1, (b, f, c, h, w), dtype=jnp.float32)   # (b, f, c, h, w)

    image, flow, (deformed_shape, verts_2d) = renderer_forward(pose, texture, shape,
                                                               render_flow=True)
    jax.block_until_ready((flow, deformed_shape, verts_2d))

    assert deformed_shape.shape == (b, f, V, 3)
    assert verts_2d.shape == (b, f, V, 3)
    assert flow.shape == (b, f - 1, V, 2)

    # numerical check against a pure-JAX reference (exact reciprocal in-kernel -> tight tolerance)
    ref_world, ref_v2d, ref_flow = _reference(pose, shape)
    assert float(jnp.max(jnp.abs(deformed_shape - ref_world))) < 1e-3
    assert float(jnp.max(jnp.abs(verts_2d - ref_v2d))) < 1e-3
    assert float(jnp.max(jnp.abs(flow - ref_flow))) < 1e-3

    print("KERNEL_OK")
</pallas_src>

<mosaic_0001>
module attributes {stable_mosaic.version = 11 : i64} {
  func.func @_transform_project_flow_kernel(%arg0: i32, %arg1: memref<8x12xf32, #tpu.memory_space<vmem>>, %arg2: memref<3x8x256xf32, #tpu.memory_space<vmem>>, %arg3: memref<3x8x256xf32, #tpu.memory_space<vmem>>, %arg4: memref<3x8x256xf32, #tpu.memory_space<vmem>>, %arg5: memref<2x8x256xf32, #tpu.memory_space<vmem>>) attributes {dimension_semantics = [#tpu.dimension_semantics<parallel>], iteration_bounds = array<i64: 1>, scalar_prefetch = 0 : i64, scratch_operands = 0 : i64, tpu.core_type = #tpu.core_type<tc>, window_params = [{pipeline_mode = #tpu.pipeline_mode<synchronous>, transform_indices = @transform_0, window_bounds = array<i64: 8, 12>}, {transform_indices = @transform_1, window_bounds = array<i64: 3, 8, 256>}, {transform_indices = @transform_2, window_bounds = array<i64: 3, 8, 256>}, {transform_indices = @transform_3, window_bounds = array<i64: 3, 8, 256>}, {transform_indices = @transform_4, window_bounds = array<i64: 2, 8, 256>}]} {
    %c0 = arith.constant 0 : index
    %c0_0 = arith.constant 0 : index
    %0 = vector.load %arg1[%c0, %c0_0] : memref<8x12xf32, #tpu.memory_space<vmem>>, vector<8x12xf32>
    %c0_1 = arith.constant 0 : index
    %c0_2 = arith.constant 0 : index
    %c0_3 = arith.constant 0 : index
    %1 = vector.load %arg2[%c0_1, %c0_2, %c0_3] : memref<3x8x256xf32, #tpu.memory_space<vmem>>, vector<1x8x256xf32>
    %2 = vector.shape_cast %1 : vector<1x8x256xf32> to vector<8x256xf32>
    %c1 = arith.constant 1 : index
    %c0_4 = arith.constant 0 : index
    %c0_5 = arith.constant 0 : index
    %3 = vector.load %arg2[%c1, %c0_4, %c0_5] : memref<3x8x256xf32, #tpu.memory_space<vmem>>, vector<1x8x256xf32>
    %4 = vector.shape_cast %3 : vector<1x8x256xf32> to vector<8x256xf32>
    %c2 = arith.constant 2 : index
    %c0_6 = arith.constant 0 : index
    %c0_7 = arith.constant 0 : index
    %5 = vector.load %arg2[%c2, %c0_6, %c0_7] : memref<3x8x256xf32, #tpu.memory_space<vmem>>, vector<1x8x256xf32>
    %6 = vector.shape_cast %5 : vector<1x8x256xf32> to vector<8x256xf32>
    %7 = vector.extract_strided_slice %0 {offsets = [0, 0], sizes = [8, 1], strides = [1, 1]} : vector<8x12xf32> to vector<8x1xf32>
    %8 = vector.broadcast %7 : vector<8x1xf32> to vector<8x256xf32>
    %9 = arith.mulf %2, %8 : vector<8x256xf32>
    %10 = vector.extract_strided_slice %0 {offsets = [0, 3], sizes = [8, 1], strides = [1, 1]} : vector<8x12xf32> to vector<8x1xf32>
    %11 = vector.broadcast %10 : vector<8x1xf32> to vector<8x256xf32>
    %12 = arith.mulf %4, %11 : vector<8x256xf32>
    %13 = arith.addf %9, %12 : vector<8x256xf32>
    %14 = vector.extract_strided_slice %0 {offsets = [0, 6], sizes = [8, 1], strides = [1, 1]} : vector<8x12xf32> to vector<8x1xf32>
    %15 = vector.broadcast %14 : vector<8x1xf32> to vector<8x256xf32>
    %16 = arith.mulf %6, %15 : vector<8x256xf32>
    %17 = arith.addf %13, %16 : vector<8x256xf32>
    %18 = vector.extract_strided_slice %0 {offsets = [0, 9], sizes = [8, 1], strides = [1, 1]} : vector<8x12xf32> to vector<8x1xf32>
    %19 = vector.broadcast %18 : vector<8x1xf32> to vector<8x256xf32>
    %20 = arith.addf %17, %19 : vector<8x256xf32>
    %21 = vector.extract_strided_slice %0 {offsets = [0, 1], sizes = [8, 1], strides = [1, 1]} : vector<8x12xf32> to vector<8x1xf32>
    %22 = vector.broadcast %21 : vector<8x1xf32> to vector<8x256xf32>
    %23 = arith.mulf %2, %22 : vector<8x256xf32>
    %24 = vector.extract_strided_slice %0 {offsets = [0, 4], sizes = [8, 1], strides = [1, 1]} : vector<8x12xf32> to vector<8x1xf32>
    %25 = vector.broadcast %24 : vector<8x1xf32> to vector<8x256xf32>
    %26 = arith.mulf %4, %25 : vector<8x256xf32>
    %27 = arith.addf %23, %26 : vector<8x256xf32>
    %28 = vector.extract_strided_slice %0 {offsets = [0, 7], sizes = [8, 1], strides = [1, 1]} : vector<8x12xf32> to vector<8x1xf32>
    %29 = vector.broadcast %28 : vector<8x1xf32> to vector<8x256xf32>
    %30 = arith.mulf %6, %29 : vector<8x256xf32>
    %31 = arith.addf %27, %30 : vector<8x256xf32>
    %32 = vector.extract_strided_slice %0 {offsets = [0, 10], sizes = [8, 1], strides = [1, 1]} : vector<8x12xf32> to vector<8x1xf32>
    %33 = vector.broadcast %32 : vector<8x1xf32> to vector<8x256xf32>
    %34 = arith.addf %31, %33 : vector<8x256xf32>
    %35 = vector.extract_strided_slice %0 {offsets = [0, 2], sizes = [8, 1], strides = [1, 1]} : vector<8x12xf32> to vector<8x1xf32>
    %36 = vector.broadcast %35 : vector<8x1xf32> to vector<8x256xf32>
    %37 = arith.mulf %2, %36 : vector<8x256xf32>
    %38 = vector.extract_strided_slice %0 {offsets = [0, 5], sizes = [8, 1], strides = [1, 1]} : vector<8x12xf32> to vector<8x1xf32>
    %39 = vector.broadcast %38 : vector<8x1xf32> to vector<8x256xf32>
    %40 = arith.mulf %4, %39 : vector<8x256xf32>
    %41 = arith.addf %37, %40 : vector<8x256xf32>
    %42 = vector.extract_strided_slice %0 {offsets = [0, 8], sizes = [8, 1], strides = [1, 1]} : vector<8x12xf32> to vector<8x1xf32>
    %43 = vector.broadcast %42 : vector<8x1xf32> to vector<8x256xf32>
    %44 = arith.mulf %6, %43 : vector<8x256xf32>
    %45 = arith.addf %41, %44 : vector<8x256xf32>
    %46 = vector.extract_strided_slice %0 {offsets = [0, 11], sizes = [8, 1], strides = [1, 1]} : vector<8x12xf32> to vector<8x1xf32>
    %47 = vector.broadcast %46 : vector<8x1xf32> to vector<8x256xf32>
    %48 = arith.addf %45, %47 : vector<8x256xf32>
    %c0_8 = arith.constant 0 : index
    %c0_9 = arith.constant 0 : index
    %c0_10 = arith.constant 0 : index
    %49 = vector.load %arg3[%c0_8, %c0_9, %c0_10] : memref<3x8x256xf32, #tpu.memory_space<vmem>>, vector<1x8x256xf32>
    %50 = vector.shape_cast %49 : vector<1x8x256xf32> to vector<8x256xf32>
    %51 = vector.shape_cast %20 : vector<8x256xf32> to vector<1x8x256xf32>
    tpu.vector_store %arg3[%c0_8, %c0_9, %c0_10], %51 {strides = array<i32>} : memref<3x8x256xf32, #tpu.memory_space<vmem>>, vector<1x8x256xf32>,
    %c1_11 = arith.constant 1 : index
    %c0_12 = arith.constant 0 : index
    %c0_13 = arith.constant 0 : index
    %52 = vector.load %arg3[%c1_11, %c0_12, %c0_13] : memref<3x8x256xf32, #tpu.memory_space<vmem>>, vector<1x8x256xf32>
    %53 = vector.shape_cast %52 : vector<1x8x256xf32> to vector<8x256xf32>
    %54 = vector.shape_cast %34 : vector<8x256xf32> to vector<1x8x256xf32>
    tpu.vector_store %arg3[%c1_11, %c0_12, %c0_13], %54 {strides = array<i32>} : memref<3x8x256xf32, #tpu.memory_space<vmem>>, vector<1x8x256xf32>,
    %c2_14 = arith.constant 2 : index
    %c0_15 = arith.constant 0 : index
    %c0_16 = arith.constant 0 : index
    %55 = vector.load %arg3[%c2_14, %c0_15, %c0_16] : memref<3x8x256xf32, #tpu.memory_space<vmem>>, vector<1x8x256xf32>
    %56 = vector.shape_cast %55 : vector<1x8x256xf32> to vector<8x256xf32>
    %57 = vector.shape_cast %48 : vector<8x256xf32> to vector<1x8x256xf32>
    tpu.vector_store %arg3[%c2_14, %c0_15, %c0_16], %57 {strides = array<i32>} : memref<3x8x256xf32, #tpu.memory_space<vmem>>, vector<1x8x256xf32>,
    %cst = arith.constant 0.000000e+00 : f32
    %58 = vector.broadcast %cst : f32 to vector<8x256xf32>
    %59 = arith.subf %58, %20 : vector<8x256xf32>
    %cst_17 = arith.constant 1.000000e+01 : f32
    %60 = vector.broadcast %cst_17 : f32 to vector<8x256xf32>
    %61 = arith.subf %60, %48 : vector<8x256xf32>
    %cst_18 = arith.constant 0.000000e+00 : f32
    %62 = vector.broadcast %cst_18 : f32 to vector<8x256xf32>
    %63 = arith.cmpf oge, %61, %62 : vector<8x256xf32>
    %cst_19 = arith.constant 1.000000e+00 : f32
    %cst_20 = arith.constant -1.000000e+00 : f32
    %64 = vector.broadcast %cst_19 : f32 to vector<8x256xf32>
    %65 = vector.broadcast %cst_20 : f32 to vector<8x256xf32>
    %66 = arith.select %63, %64, %65 : vector<8x256xi1>, vector<8x256xf32>
    %67 = math.absf %61 : vector<8x256xf32>
    %cst_21 = arith.constant 1.000000e-07 : f32
    %68 = vector.broadcast %cst_21 : f32 to vector<8x256xf32>
    %69 = arith.maximumf %67, %68 : vector<8x256xf32>
    %70 = arith.mulf %66, %69 : vector<8x256xf32>
    %cst_22 = arith.constant 1.000000e+00 : f32
    %71 = vector.broadcast %cst_22 : f32 to vector<8x256xf32>
    %72 = arith.divf %71, %70 : vector<8x256xf32>
    %cst_23 = arith.constant 36.0856667 : f32
    %73 = vector.broadcast %cst_23 : f32 to vector<8x256xf32>
    %74 = arith.mulf %73, %59 : vector<8x256xf32>
    %75 = arith.mulf %74, %72 : vector<8x256xf32>
    %cst_24 = arith.constant 8.000000e+00 : f32
    %76 = vector.broadcast %cst_24 : f32 to vector<8x256xf32>
    %77 = arith.subf %76, %75 : vector<8x256xf32>
    %cst_25 = arith.constant 36.0856667 : f32
    %78 = vector.broadcast %cst_25 : f32 to vector<8x256xf32>
    %79 = arith.mulf %78, %34 : vector<8x256xf32>
    %80 = arith.mulf %79, %72 : vector<8x256xf32>
    %cst_26 = arith.constant 8.000000e+00 : f32
    %81 = vector.broadcast %cst_26 : f32 to vector<8x256xf32>
    %82 = arith.subf %81, %80 : vector<8x256xf32>
    %cst_27 = arith.constant 1.000000e+00 : f32
    %83 = vector.broadcast %cst_27 : f32 to vector<8x256xf32>
    %84 = arith.subf %61, %83 : vector<8x256xf32>
    %cst_28 = arith.constant 1.01010096 : f32
    %85 = vector.broadcast %cst_28 : f32 to vector<8x256xf32>
    %86 = arith.mulf %85, %84 : vector<8x256xf32>
    %87 = arith.mulf %86, %72 : vector<8x256xf32>
    %c0_29 = arith.constant 0 : index
    %c0_30 = arith.constant 0 : index
    %c0_31 = arith.constant 0 : index
    %88 = vector.load %arg4[%c0_29, %c0_30, %c0_31] : memref<3x8x256xf32, #tpu.memory_space<vmem>>, vector<1x8x256xf32>
    %89 = vector.shape_cast %88 : vector<1x8x256xf32> to vector<8x256xf32>
    %90 = vector.shape_cast %77 : vector<8x256xf32> to vector<1x8x256xf32>
    tpu.vector_store %arg4[%c0_29, %c0_30, %c0_31], %90 {strides = array<i32>} : memref<3x8x256xf32, #tpu.memory_space<vmem>>, vector<1x8x256xf32>,
    %c1_32 = arith.constant 1 : index
    %c0_33 = arith.constant 0 : index
    %c0_34 = arith.constant 0 : index
    %91 = vector.load %arg4[%c1_32, %c0_33, %c0_34] : memref<3x8x256xf32, #tpu.memory_space<vmem>>, vector<1x8x256xf32>
    %92 = vector.shape_cast %91 : vector<1x8x256xf32> to vector<8x256xf32>
    %93 = vector.shape_cast %82 : vector<8x256xf32> to vector<1x8x256xf32>
    tpu.vector_store %arg4[%c1_32, %c0_33, %c0_34], %93 {strides = array<i32>} : memref<3x8x256xf32, #tpu.memory_space<vmem>>, vector<1x8x256xf32>,
    %c2_35 = arith.constant 2 : index
    %c0_36 = arith.constant 0 : index
    %c0_37 = arith.constant 0 : index
    %94 = vector.load %arg4[%c2_35, %c0_36, %c0_37] : memref<3x8x256xf32, #tpu.memory_space<vmem>>, vector<1x8x256xf32>
    %95 = vector.shape_cast %94 : vector<1x8x256xf32> to vector<8x256xf32>
    %96 = vector.shape_cast %87 : vector<8x256xf32> to vector<1x8x256xf32>
    tpu.vector_store %arg4[%c2_35, %c0_36, %c0_37], %96 {strides = array<i32>} : memref<3x8x256xf32, #tpu.memory_space<vmem>>, vector<1x8x256xf32>,
    %97 = vector.extract_strided_slice %77 {offsets = [1, 0], sizes = [7, 256], strides = [1, 1]} : vector<8x256xf32> to vector<7x256xf32>
    %98 = vector.extract_strided_slice %77 {offsets = [7, 0], sizes = [1, 256], strides = [1, 1]} : vector<8x256xf32> to vector<1x256xf32>
    %99 = tpu.concatenate %97, %98 in 0 : vector<7x256xf32>, vector<1x256xf32> -> vector<8x256xf32>
    %100 = vector.extract_strided_slice %82 {offsets = [1, 0], sizes = [7, 256], strides = [1, 1]} : vector<8x256xf32> to vector<7x256xf32>
    %101 = vector.extract_strided_slice %82 {offsets = [7, 0], sizes = [1, 256], strides = [1, 1]} : vector<8x256xf32> to vector<1x256xf32>
    %102 = tpu.concatenate %100, %101 in 0 : vector<7x256xf32>, vector<1x256xf32> -> vector<8x256xf32>
    %103 = arith.subf %99, %77 : vector<8x256xf32>
    %cst_38 = arith.constant 3.125000e-02 : f32
    %104 = vector.broadcast %cst_38 : f32 to vector<8x256xf32>
    %105 = arith.mulf %103, %104 : vector<8x256xf32>
    %cst_39 = arith.constant 5.000000e-01 : f32
    %106 = vector.broadcast %cst_39 : f32 to vector<8x256xf32>
    %107 = arith.addf %105, %106 : vector<8x256xf32>
    %c0_40 = arith.constant 0 : index
    %c0_41 = arith.constant 0 : index
    %c0_42 = arith.constant 0 : index
    %108 = vector.load %arg5[%c0_40, %c0_41, %c0_42] : memref<2x8x256xf32, #tpu.memory_space<vmem>>, vector<1x8x256xf32>
    %109 = vector.shape_cast %108 : vector<1x8x256xf32> to vector<8x256xf32>
    %110 = vector.shape_cast %107 : vector<8x256xf32> to vector<1x8x256xf32>
    tpu.vector_store %arg5[%c0_40, %c0_41, %c0_42], %110 {strides = array<i32>} : memref<2x8x256xf32, #tpu.memory_space<vmem>>, vector<1x8x256xf32>,
    %111 = arith.subf %102, %82 : vector<8x256xf32>
    %cst_43 = arith.constant 3.125000e-02 : f32
    %112 = vector.broadcast %cst_43 : f32 to vector<8x256xf32>
    %113 = arith.mulf %111, %112 : vector<8x256xf32>
    %cst_44 = arith.constant 5.000000e-01 : f32
    %114 = vector.broadcast %cst_44 : f32 to vector<8x256xf32>
    %115 = arith.addf %113, %114 : vector<8x256xf32>
    %c1_45 = arith.constant 1 : index
    %c0_46 = arith.constant 0 : index
    %c0_47 = arith.constant 0 : index
    %116 = vector.load %arg5[%c1_45, %c0_46, %c0_47] : memref<2x8x256xf32, #tpu.memory_space<vmem>>, vector<1x8x256xf32>
    %117 = vector.shape_cast %116 : vector<1x8x256xf32> to vector<8x256xf32>
    %118 = vector.shape_cast %115 : vector<8x256xf32> to vector<1x8x256xf32>
    tpu.vector_store %arg5[%c1_45, %c0_46, %c0_47], %118 {strides = array<i32>} : memref<2x8x256xf32, #tpu.memory_space<vmem>>, vector<1x8x256xf32>,
    return
  }
  func.func @transform_0(%arg0: i32) -> (i32, i32) {
    %c0_i32 = arith.constant 0 : i32
    %c0_i32_0 = arith.constant 0 : i32
    %c0_i32_1 = arith.constant 0 : i32
    return %c0_i32, %c0_i32_0 : i32, i32
  }
  func.func @transform_1(%arg0: i32) -> (i32, i32, i32) {
    %c0_i32 = arith.constant 0 : i32
    %c0_i32_0 = arith.constant 0 : i32
    %c0_i32_1 = arith.constant 0 : i32
    return %c0_i32, %c0_i32_0, %arg0 : i32, i32, i32
  }
  func.func @transform_2(%arg0: i32) -> (i32, i32, i32) {
    %c0_i32 = arith.constant 0 : i32
    %c0_i32_0 = arith.constant 0 : i32
    %c0_i32_1 = arith.constant 0 : i32
    return %c0_i32, %c0_i32_0, %arg0 : i32, i32, i32
  }
  func.func @transform_3(%arg0: i32) -> (i32, i32, i32) {
    %c0_i32 = arith.constant 0 : i32
    %c0_i32_0 = arith.constant 0 : i32
    %c0_i32_1 = arith.constant 0 : i32
    return %c0_i32, %c0_i32_0, %arg0 : i32, i32, i32
  }
  func.func @transform_4(%arg0: i32) -> (i32, i32, i32) {
    %c0_i32 = arith.constant 0 : i32
    %c0_i32_0 = arith.constant 0 : i32
    %c0_i32_1 = arith.constant 0 : i32
    return %c0_i32, %c0_i32_0, %arg0 : i32, i32, i32
  }
}

</mosaic_0001>

<llo_original>
// kernel: renderer_forward.1
$region0: #{renderer_forward.1}
  #allocation0 [shape = 'u32[]', space=smem, size = 0x4, offset = 0x4, fixed_abs, tag = 'smem constant byte address 0x4 - core index']
  #allocation1 [shape = 'u32[144,128]{1,0:T(1,128)}', space=vmem, size = 0x12000, scoped, tag = 'internal scratch']
  %s0 = inlined_call_operand.vmem [shape: f32[8,12], index: 0, kind: input, shape index: {}]
  %s1 = inlined_call_operand.vmem [shape: f32[3,8,256], index: 1, kind: input, shape index: {}]
  %s2 = inlined_call_operand.vmem [shape: f32[3,8,256], index: 2, kind: output, shape index: {0}]
  %s3 = inlined_call_operand.vmem [shape: f32[3,8,256], index: 3, kind: output, shape index: {1}]
  %s4 = inlined_call_operand.vmem [shape: f32[2,8,256], index: 4, kind: output, shape index: {2}]
  %5 = xla_tuple %s2, %s3, %s4
  %s6 = sld [smem:[#allocation0]]
  $region34: #{renderer_forward.1} parent=0
    _
  %s8 = ssub.s32 1, %s6
  %s9 = scalar_select 0, %s8, %s6
  // Predicated region
  $region2: #{renderer_forward.1} parent=0 // pred_check
    _
  $region3: #{renderer_forward.1} parent=0 // pred_check_branch
    %11 = sbr.rel (0) target = $region5
  $region4: #{renderer_forward.1} parent=0 // pred_region
    _
  $region5: #{renderer_forward.1} parent=0 // pred_fallthru
    _
  // Predicated region
  $region6: #{renderer_forward.1} parent=0 // pred_check
    _
  $region7: #{renderer_forward.1} parent=0 // pred_check_branch
    %13 = sbr.rel (0) target = $region9
  $region8: #{renderer_forward.1} parent=0 // pred_region
    _
  $region9: #{renderer_forward.1} parent=0 // pred_fallthru
    _
  %v14 = vld [vmem:[%s0] sm:$0xff]
  %v15 = vld [vmem:[%s1] sm:$0xff]
  %v16 = vld [vmem:[%s1 + $0x8] sm:$0xff]
  %s17 = scalar_lea.vmem %s1, 16
  %v18 = vld [vmem:[%s17] sm:$0xff]
  %v19 = vld [vmem:[%s17 + $0x8] sm:$0xff]
  %s20 = scalar_lea.vmem %s1, 32
  %v21 = vld [vmem:[%s20] sm:$0xff]
  %v22 = vld [vmem:[%s20 + $0x8] sm:$0xff]
  %24 = vset.pattern.permute.xlu0 0
  %25 = vperm.xlu0 %24, %v14
  %v26 = vpop.permute.xlu0 %25
  %v28 = vmul.f32 %v15, %v26
  %v29 = vmul.f32 %v16, %v26
  %30 = vset.pattern.permute.xlu0 3
  %31 = vperm.xlu0 %30, %v14
  %v32 = vpop.permute.xlu0 %31
  %v34 = vmul.f32 %v18, %v32
  %v35 = vmul.f32 %v19, %v32
  %v36 = vadd.f32 %v28, %v34
  %v37 = vadd.f32 %v29, %v35
  %38 = vset.pattern.permute.xlu0 6
  %39 = vperm.xlu0 %38, %v14
  %v40 = vpop.permute.xlu0 %39
  %v42 = vmul.f32 %v21, %v40
  %v43 = vmul.f32 %v22, %v40
  %v44 = vadd.f32 %v36, %v42
  %v45 = vadd.f32 %v37, %v43
  %46 = vset.pattern.permute.xlu0 9
  %47 = vperm.xlu0 %46, %v14
  %v48 = vpop.permute.xlu0 %47
  %v50 = vadd.f32 %v44, %v48
  %v51 = vadd.f32 %v45, %v48
  %52 = vset.pattern.permute.xlu0 1
  %53 = vperm.xlu0 %52, %v14
  %v54 = vpop.permute.xlu0 %53
  %v56 = vmul.f32 %v15, %v54
  %v57 = vmul.f32 %v16, %v54
  %58 = vset.pattern.permute.xlu0 4
  %59 = vperm.xlu0 %58, %v14
  %v60 = vpop.permute.xlu0 %59
  %v62 = vmul.f32 %v18, %v60
  %v63 = vmul.f32 %v19, %v60
  %v64 = vadd.f32 %v56, %v62
  %v65 = vadd.f32 %v57, %v63
  %66 = vset.pattern.permute.xlu0 7
  %67 = vperm.xlu0 %66, %v14
  %v68 = vpop.permute.xlu0 %67
  %v70 = vmul.f32 %v21, %v68
  %v71 = vmul.f32 %v22, %v68
  %v72 = vadd.f32 %v64, %v70
  %v73 = vadd.f32 %v65, %v71
  %74 = vset.pattern.permute.xlu0 10
  %75 = vperm.xlu0 %74, %v14
  %v76 = vpop.permute.xlu0 %75
  %v78 = vadd.f32 %v72, %v76
  %v79 = vadd.f32 %v73, %v76
  %80 = vset.pattern.permute.xlu0 2
  %81 = vperm.xlu0 %80, %v14
  %v82 = vpop.permute.xlu0 %81
  %v84 = vmul.f32 %v15, %v82
  %v85 = vmul.f32 %v16, %v82
  %86 = vset.pattern.permute.xlu0 5
  %87 = vperm.xlu0 %86, %v14
  %v88 = vpop.permute.xlu0 %87
  %v90 = vmul.f32 %v18, %v88
  %v91 = vmul.f32 %v19, %v88
  %v92 = vadd.f32 %v84, %v90
  %v93 = vadd.f32 %v85, %v91
  %94 = vset.pattern.permute.xlu0 8
  %95 = vperm.xlu0 %94, %v14
  %v96 = vpop.permute.xlu0 %95
  %v98 = vmul.f32 %v21, %v96
  %v99 = vmul.f32 %v22, %v96
  %v100 = vadd.f32 %v92, %v98
  %v101 = vadd.f32 %v93, %v99
  %102 = vset.pattern.permute.xlu0 11
  %103 = vperm.xlu0 %102, %v14
  %v104 = vpop.permute.xlu0 %103
  %v106 = vadd.f32 %v100, %v104
  %v107 = vadd.f32 %v101, %v104
  %108 = vst [vmem:[%s2] sm:$0xff] %v50
  %109 = vst [vmem:[%s2 + $0x8] sm:$0xff] %v51
  %s110 = scalar_lea.vmem %s2, 16
  %111 = vst [vmem:[%s110] sm:$0xff] %v78
  %112 = vst [vmem:[%s110 + $0x8] sm:$0xff] %v79
  %s113 = scalar_lea.vmem %s2, 32
  %114 = vst [vmem:[%s113] sm:$0xff] %v106
  %115 = vst [vmem:[%s113 + $0x8] sm:$0xff] %v107
  %v116 = vsub.f32 0.0, %v50
  %v117 = vsub.f32 0.0, %v51
  %v118 = vsub.f32 10.0, %v106
  %v119 = vsub.f32 10.0, %v107
  %vm120 = vcmp.ge.f32.partialorder %v118, 0.0
  %vm121 = vcmp.ge.f32.partialorder %v119, 0.0
  %v122 = vsel %vm120, 1.0, -1.0
  %v123 = vsel %vm121, 1.0, -1.0
  %v124 = vand.u32 2147483647, %v118
  %v125 = vand.u32 2147483647, %v119
  %v126 = vmax.f32 %v124, 1e-07
  %v127 = vmax.f32 %v125, 1e-07
  %v128 = vmul.f32 %v122, %v126
  %v129 = vmul.f32 %v123, %v127
  %v130 = vrcp.pop %v128
  %v131 = vmul.f32 1.0, %v130
  %v132 = vrcp.pop %v129
  %v133 = vmul.f32 1.0, %v132
  %v134 = vmul.f32 %v116, 36.085667
  %v135 = vmul.f32 %v117, 36.085667
  %v136 = vmul.f32 %v134, %v131
  %v137 = vmul.f32 %v135, %v133
  %v138 = vsub.f32 8.0, %v136
  %v139 = vsub.f32 8.0, %v137
  %v140 = vmul.f32 %v78, 36.085667
  %v141 = vmul.f32 %v79, 36.085667
  %v142 = vmul.f32 %v140, %v131
  %v143 = vmul.f32 %v141, %v133
  %v144 = vsub.f32 8.0, %v142
  %v145 = vsub.f32 8.0, %v143
  %v146 = vsub.f32 %v118, 1.0
  %v147 = vsub.f32 %v119, 1.0
  %v148 = vmul.f32 %v146, 1.010101
  %v149 = vmul.f32 %v147, 1.010101
  %v150 = vmul.f32 %v148, %v131
  %v151 = vmul.f32 %v149, %v133
  %152 = vst [vmem:[%s3] sm:$0xff] %v138
  %153 = vst [vmem:[%s3 + $0x8] sm:$0xff] %v139
  %s154 = scalar_lea.vmem %s3, 16
  %155 = vst [vmem:[%s154] sm:$0xff] %v144
  %156 = vst [vmem:[%s154 + $0x8] sm:$0xff] %v145
  %s157 = scalar_lea.vmem %s3, 32
  %158 = vst [vmem:[%s157] sm:$0xff] %v150
  %159 = vst [vmem:[%s157 + $0x8] sm:$0xff] %v151
  %v162 = vrot.slane %v138, 1
  %v163 = vrot.slane %v139, 1
  %vm166 = vcmask 1046528
  %v167 = vsel %vm166, %v162, %v138
  %v168 = vsel %vm166, %v163, %v139
  %v171 = vrot.slane %v144, 1
  %v172 = vrot.slane %v145, 1
  %v175 = vsel %vm166, %v171, %v144
  %v176 = vsel %vm166, %v172, %v145
  %v177 = vsub.f32 %v167, %v138
  %v178 = vsub.f32 %v168, %v139
  %v179 = vmul.f32 %v177, 0.03125
  %v180 = vmul.f32 %v178, 0.03125
  %v181 = vadd.f32 %v179, 0.5
  %v182 = vadd.f32 %v180, 0.5
  %183 = vst [vmem:[%s4] sm:$0xff] %v181
  %184 = vst [vmem:[%s4 + $0x8] sm:$0xff] %v182
  %v185 = vsub.f32 %v175, %v144
  %v186 = vsub.f32 %v176, %v145
  %v187 = vmul.f32 %v185, 0.03125
  %v188 = vmul.f32 %v186, 0.03125
  %v189 = vadd.f32 %v187, 0.5
  %v190 = vadd.f32 %v188, 0.5
  %s191 = scalar_lea.vmem %s4, 16
  %192 = vst [vmem:[%s191] sm:$0xff] %v189
  %193 = vst [vmem:[%s191 + $0x8] sm:$0xff] %v190
  // Predicated region
  $region10: #{renderer_forward.1} parent=0 // pred_check
    _
  $region11: #{renderer_forward.1} parent=0 // pred_check_branch
    %195 = sbr.rel (0) target = $region13
  $region12: #{renderer_forward.1} parent=0 // pred_region
    _
  $region13: #{renderer_forward.1} parent=0 // pred_fallthru
    _
  // Predicated region
  $region14: #{renderer_forward.1} parent=0 // pred_check
    _
  $region15: #{renderer_forward.1} parent=0 // pred_check_branch
    %197 = sbr.rel (0) target = $region17
  $region16: #{renderer_forward.1} parent=0 // pred_region
    _
  $region17: #{renderer_forward.1} parent=0 // pred_fallthru
    _
  // Predicated region
  $region18: #{renderer_forward.1} parent=0 // pred_check
    _
  $region19: #{renderer_forward.1} parent=0 // pred_check_branch
    %199 = sbr.rel (0) target = $region21
  $region20: #{renderer_forward.1} parent=0 // pred_region
    _
  $region21: #{renderer_forward.1} parent=0 // pred_fallthru
    _
  // Predicated region
  $region22: #{renderer_forward.1} parent=0 // pred_check
    _
  $region23: #{renderer_forward.1} parent=0 // pred_check_branch
    %201 = sbr.rel (0) target = $region25
  $region24: #{renderer_forward.1} parent=0 // pred_region
    _
  $region25: #{renderer_forward.1} parent=0 // pred_fallthru
    _
  // Predicated region
  $region26: #{renderer_forward.1} parent=0 // pred_check
    _
  $region27: #{renderer_forward.1} parent=0 // pred_check_branch
    %203 = sbr.rel (0) target = $region29
  $region28: #{renderer_forward.1} parent=0 // pred_region
    _
  $region29: #{renderer_forward.1} parent=0 // pred_fallthru
    _
  // Predicated region
  $region30: #{renderer_forward.1} parent=0 // pred_check
    _
  $region31: #{renderer_forward.1} parent=0 // pred_check_branch
    %205 = sbr.rel (0) target = $region33
  $region32: #{renderer_forward.1} parent=0 // pred_region
    _
  $region33: #{renderer_forward.1} parent=0 // pred_fallthru
    _

</llo_original>
